<compile_context>
chip_gen: v6e
topology: v6e:2x2x1
jax: 0.10.0
libtpu: 0.0.40
codegen_flags: <defaults>
</compile_context>

<pallas_src>
import math

import jax
import jax.numpy as jnp
from jax.experimental import pallas as pl
from jax.experimental.pallas import tpu as pltpu


def _round_up(x, m):
    return ((x + m - 1) // m) * m


def _choose_freq_tiling(F, C_in, C_out, budget_bytes):
    """Pick (Fp, tile_f): padded frequency length and lane-dense tile size.

    The budget counts every double-buffered f32 block resident per grid step:
    x (2*C_in), w (2*C_in*C_out) and y (2*C_out) f32 values per frequency
    column, each double-buffered by the BlockSpec pipeline.
    """
    per_lane = 4 * 2 * (2 * C_in + 2 * C_in * C_out + 2 * C_out)
    tile_cap = max(128, (budget_bytes // per_lane) // 128 * 128)
    Fp = _round_up(F, 128)
    if Fp <= tile_cap:
        return Fp, Fp                      # one fat frequency block
    return _round_up(F, tile_cap), tile_cap


# ----------------------------------------------------------------------------
# Pallas kernel 1: Fourier-domain complex multiply + reduction over C_in.
# ----------------------------------------------------------------------------
def _cmul_reduce_kernel(x_ref, w_ref, y_ref):
    # Block shapes:
    #   x_ref : (1,     2, C_in,  tile_f)   one batch element, re/im packed
    #   w_ref : (C_out, 2, C_in,  tile_f)   all output channels
    #   y_ref : (1,     2, C_out, tile_f)
    x = x_ref[...]
    w = w_ref[...]
    xr = x[0, 0]                      # (C_in, tile_f)
    xi = x[0, 1]
    wr = w[:, 0]                      # (C_out, C_in, tile_f)
    wi = w[:, 1]
    # (xr + i xi) * (wr + i wi), summed over C_in (non-minor axis -> VPU adds).
    y_ref[0, 0] = jnp.sum(xr[None] * wr - xi[None] * wi, axis=1)
    y_ref[0, 1] = jnp.sum(xr[None] * wi + xi[None] * wr, axis=1)


def fourier_cmul_reduce(x_ri, w_ri, *, tile_f):
    B, _, C_in, Fp = x_ri.shape
    C_out = w_ri.shape[0]
    n_f = Fp // tile_f

    # Grid order (F_tiles, B): for a fixed frequency tile the weight block
    # index is constant across the inner batch axis, so Pallas re-uses the
    # resident weight tile (block-index revisit skip) instead of fetching it
    # B times.
    x_spec = pl.BlockSpec((1, 2, C_in, tile_f), lambda f, b: (b, 0, 0, f))
    w_spec = pl.BlockSpec((C_out, 2, C_in, tile_f), lambda f, b: (0, 0, 0, f))
    y_spec = pl.BlockSpec((1, 2, C_out, tile_f), lambda f, b: (b, 0, 0, f))

    return pl.pallas_call(
        _cmul_reduce_kernel,
        out_shape=jax.ShapeDtypeStruct((B, 2, C_out, Fp), x_ri.dtype),
        grid=(n_f, B),
        in_specs=[x_spec, w_spec],
        out_specs=y_spec,
        compiler_params=pltpu.CompilerParams(
            dimension_semantics=("parallel", "parallel"),
            vmem_limit_bytes=48 * 1024 * 1024),
    )(x_ri, w_ri)


# ----------------------------------------------------------------------------
# Pallas kernel 2: per-channel bias add on the cropped, lane-dense output.
# ----------------------------------------------------------------------------
def _bias_add_kernel(feat_ref, bias_ref, out_ref):
    # feat_ref/out_ref: (1, C_out, H*W); bias_ref: (1, C_out, 1) broadcasts.
    out_ref[...] = feat_ref[...] + bias_ref[...]


def bias_add(feats_flat, bias_311):
    B, C_out, HW = feats_flat.shape
    return pl.pallas_call(
        _bias_add_kernel,
        out_shape=jax.ShapeDtypeStruct((B, C_out, HW), feats_flat.dtype),
        grid=(B,),
        in_specs=[
            pl.BlockSpec((1, C_out, HW), lambda b: (b, 0, 0)),
            # bias is a few floats; the padded (8,128) VMEM tile is negligible.
            pl.BlockSpec((1, C_out, 1), lambda b: (0, 0, 0)),
        ],
        out_specs=pl.BlockSpec((1, C_out, HW), lambda b: (b, 0, 0)),
        compiler_params=pltpu.CompilerParams(
            dimension_semantics=("parallel",)),
    )(feats_flat, bias_311)


# ----------------------------------------------------------------------------
# Full forward (padding=True, stride=(1,1), bias=True, reduce_channels=True,
# real_feats_mode='index').
# ----------------------------------------------------------------------------
def fourier_conv2d_forward(im, weight, bias, *,
                           vmem_block_budget=32 * 1024 * 1024):
    B, C_in, H, W = im.shape
    C_out = weight.shape[0]
    Fh, Fw = 2 * H - 1, 2 * W - 1
    F = Fh * Fw

    # 1. zero-pad + 2D FFT (XLA; no Pallas FFT primitive).
    padded = jnp.pad(im, ((0, 0), (0, 0), (0, Fh - H), (0, Fw - W)))
    F_im = jnp.fft.fft2(padded)                                  # (B,C_in,Fh,Fw) c64

    # 2. pack re/im and flatten the frequency axes to a lane-dense last dim.
    x_ri = jnp.stack([F_im.real, F_im.imag], axis=1).astype(jnp.float32)
    x_ri = x_ri.reshape(B, 2, C_in, F)
    w_ri = jnp.moveaxis(weight, -1, 1).astype(jnp.float32)       # (C_out,2,C_in,Fh,Fw)
    w_ri = w_ri.reshape(C_out, 2, C_in, F)

    Fp, tile_f = _choose_freq_tiling(F, C_in, C_out, vmem_block_budget)
    if Fp != F:
        pad = Fp - F
        x_ri = jnp.pad(x_ri, ((0, 0), (0, 0), (0, 0), (0, pad)))
        w_ri = jnp.pad(w_ri, ((0, 0), (0, 0), (0, 0), (0, pad)))

    # 3. Pallas hot path: complex multiply + C_in reduction.
    y_ri = fourier_cmul_reduce(x_ri, w_ri, tile_f=tile_f)        # (B,2,C_out,Fp)

    # 4. inverse FFT, take real part ('index' mode -> component 0).
    y_ri = y_ri[..., :F].reshape(B, 2, C_out, Fh, Fw)
    y_c = y_ri[:, 0] + 1j * y_ri[:, 1]
    feats = jnp.fft.ifft2(y_c).real.astype(jnp.float32)          # (B,C_out,Fh,Fw)

    # 5. center crop (cheap XLA slice fused with the IFFT epilogue), then
    #    Pallas bias add on the flattened, lane-dense layout.
    cl_h, cl_w = (H - 1) // 2, (W - 1) // 2
    cropped = feats[:, :, cl_h:cl_h + H, cl_w:cl_w + W]          # (B,C_out,H,W)
    out = bias_add(cropped.reshape(B, C_out, H * W),
                   bias.reshape(1, C_out, 1))
    return out.reshape(B, C_out, H, W)


# ----------------------------------------------------------------------------
# Pure-JAX reference following the PyTorch op ordering exactly
# (per-(o, c) IFFT, real part, crop, sum over C_in, add bias).
# ----------------------------------------------------------------------------
def reference_forward(im, weight, bias):
    B, C_in, H, W = im.shape
    Fh, Fw = 2 * H - 1, 2 * W - 1
    padded = jnp.pad(im, ((0, 0), (0, 0), (0, Fh - H), (0, Fw - W)))
    F_im = jnp.fft.fft2(padded)                                   # (B,C_in,Fh,Fw)
    w_c = weight[..., 0] + 1j * weight[..., 1]                    # (C_out,C_in,Fh,Fw)
    feats = F_im[:, None, :, :, :] * w_c[None]                    # (B,C_out,C_in,Fh,Fw)
    real_feats = jnp.fft.ifft2(feats).real
    cl_h, cr_h = (H - 1) // 2, H // 2
    cl_w, cr_w = (W - 1) // 2, W // 2
    real_feats = real_feats[..., cl_h:Fh - cr_h, cl_w:Fw - cr_w]  # (B,C_out,C_in,H,W)
    real_feats = real_feats.sum(2)                                # reduce_channels
    return (real_feats + bias).astype(jnp.float32)


if __name__ == "__main__":
    # Small shapes: B=2, C_in=4, C_out=3, H=W=16.
    # FourierConv2D(4, 3, kernel_size=16): with padding=True, stride=(1,1) the
    # stored kernel size is (2*16-1, 2*16-1) = (31, 31), matching the FFT size.
    B, C_in, C_out, H, W = 2, 4, 3, 16, 16
    Kh, Kw = 2 * H - 1, 2 * W - 1

    key = jax.random.PRNGKey(0)
    k_im, k_w, k_b = jax.random.split(key, 3)

    im = jax.random.normal(k_im, (B, C_in, H, W), dtype=jnp.float32)

    # Deterministic parameter init matching torch's kaiming_uniform_(a=sqrt(5))
    # bounds: fan_in = C_in * Kh * Kw * 2, bound = 1/sqrt(fan_in).
    fan_in = C_in * Kh * Kw * 2
    bound = 1.0 / math.sqrt(fan_in)
    weight = jax.random.uniform(
        k_w, (C_out, C_in, Kh, Kw, 2), dtype=jnp.float32,
        minval=-bound, maxval=bound)
    bias = jax.random.uniform(
        k_b, (C_out, 1, 1), dtype=jnp.float32, minval=-bound, maxval=bound)

    fwd = jax.jit(fourier_conv2d_forward)
    ref_fwd = jax.jit(reference_forward)

    out = jax.block_until_ready(fwd(im, weight, bias))
    ref = jax.block_until_ready(ref_fwd(im, weight, bias))

    assert out.shape == (B, C_out, H, W), out.shape
    max_err = float(jnp.max(jnp.abs(out - ref)))
    assert jnp.allclose(out, ref, atol=2e-3, rtol=2e-3), max_err

    print("KERNEL_OK")
</pallas_src>

<mosaic_0001>
module attributes {stable_mosaic.version = 11 : i64} {
  func.func @_cmul_reduce_kernel(%arg0: i32, %arg1: i32, %arg2: memref<1x2x4x1024xf32, #tpu.memory_space<vmem>>, %arg3: memref<3x2x4x1024xf32, #tpu.memory_space<vmem>>, %arg4: memref<1x2x3x1024xf32, #tpu.memory_space<vmem>>) attributes {dimension_semantics = [#tpu.dimension_semantics<parallel>, #tpu.dimension_semantics<parallel>], iteration_bounds = array<i64: 1, 2>, scalar_prefetch = 0 : i64, scratch_operands = 0 : i64, tpu.core_type = #tpu.core_type<tc>, window_params = [{transform_indices = @transform_0, window_bounds = array<i64: 1, 2, 4, 1024>}, {transform_indices = @transform_1, window_bounds = array<i64: 3, 2, 4, 1024>}, {transform_indices = @transform_2, window_bounds = array<i64: 1, 2, 3, 1024>}]} {
    %c0 = arith.constant 0 : index
    %c0_0 = arith.constant 0 : index
    %c0_1 = arith.constant 0 : index
    %c0_2 = arith.constant 0 : index
    %0 = vector.load %arg2[%c0, %c0_0, %c0_1, %c0_2] : memref<1x2x4x1024xf32, #tpu.memory_space<vmem>>, vector<1x2x4x1024xf32>
    %c0_3 = arith.constant 0 : index
    %c0_4 = arith.constant 0 : index
    %c0_5 = arith.constant 0 : index
    %c0_6 = arith.constant 0 : index
    %1 = vector.load %arg3[%c0_3, %c0_4, %c0_5, %c0_6] : memref<3x2x4x1024xf32, #tpu.memory_space<vmem>>, vector<3x2x4x1024xf32>
    %2 = vector.extract_strided_slice %0 {offsets = [0, 0, 0, 0], sizes = [1, 1, 4, 1024], strides = [1, 1, 1, 1]} : vector<1x2x4x1024xf32> to vector<1x1x4x1024xf32>
    %3 = vector.shape_cast %2 : vector<1x1x4x1024xf32> to vector<4x1024xf32>
    %4 = vector.extract_strided_slice %0 {offsets = [0, 1, 0, 0], sizes = [1, 1, 4, 1024], strides = [1, 1, 1, 1]} : vector<1x2x4x1024xf32> to vector<1x1x4x1024xf32>
    %5 = vector.shape_cast %4 : vector<1x1x4x1024xf32> to vector<4x1024xf32>
    %6 = vector.extract_strided_slice %1 {offsets = [0, 0, 0, 0], sizes = [3, 1, 4, 1024], strides = [1, 1, 1, 1]} : vector<3x2x4x1024xf32> to vector<3x1x4x1024xf32>
    %7 = vector.shape_cast %6 : vector<3x1x4x1024xf32> to vector<3x4x1024xf32>
    %8 = vector.extract_strided_slice %1 {offsets = [0, 1, 0, 0], sizes = [3, 1, 4, 1024], strides = [1, 1, 1, 1]} : vector<3x2x4x1024xf32> to vector<3x1x4x1024xf32>
    %9 = vector.shape_cast %8 : vector<3x1x4x1024xf32> to vector<3x4x1024xf32>
    %10 = vector.shape_cast %3 : vector<4x1024xf32> to vector<1x4x1024xf32>
    %11 = vector.broadcast %10 : vector<1x4x1024xf32> to vector<3x4x1024xf32>
    %12 = arith.mulf %11, %7 : vector<3x4x1024xf32>
    %13 = vector.shape_cast %5 : vector<4x1024xf32> to vector<1x4x1024xf32>
    %14 = vector.broadcast %13 : vector<1x4x1024xf32> to vector<3x4x1024xf32>
    %15 = arith.mulf %14, %9 : vector<3x4x1024xf32>
    %16 = arith.subf %12, %15 : vector<3x4x1024xf32>
    %cst = arith.constant dense<0.000000e+00> : vector<3x1024xf32>
    %17 = vector.multi_reduction <add>, %16, %cst [1] : vector<3x4x1024xf32> to vector<3x1024xf32>
    %c0_7 = arith.constant 0 : index
    %c0_8 = arith.constant 0 : index
    %c0_9 = arith.constant 0 : index
    %c0_10 = arith.constant 0 : index
    %18 = vector.load %arg4[%c0_7, %c0_8, %c0_9, %c0_10] : memref<1x2x3x1024xf32, #tpu.memory_space<vmem>>, vector<1x1x3x1024xf32>
    %19 = vector.shape_cast %18 : vector<1x1x3x1024xf32> to vector<3x1024xf32>
    %20 = vector.shape_cast %17 : vector<3x1024xf32> to vector<1x1x3x1024xf32>
    tpu.vector_store %arg4[%c0_7, %c0_8, %c0_9, %c0_10], %20 {strides = array<i32>} : memref<1x2x3x1024xf32, #tpu.memory_space<vmem>>, vector<1x1x3x1024xf32>,
    %21 = vector.shape_cast %3 : vector<4x1024xf32> to vector<1x4x1024xf32>
    %22 = vector.broadcast %21 : vector<1x4x1024xf32> to vector<3x4x1024xf32>
    %23 = arith.mulf %22, %9 : vector<3x4x1024xf32>
    %24 = vector.shape_cast %5 : vector<4x1024xf32> to vector<1x4x1024xf32>
    %25 = vector.broadcast %24 : vector<1x4x1024xf32> to vector<3x4x1024xf32>
    %26 = arith.mulf %25, %7 : vector<3x4x1024xf32>
    %27 = arith.addf %23, %26 : vector<3x4x1024xf32>
    %cst_11 = arith.constant dense<0.000000e+00> : vector<3x1024xf32>
    %28 = vector.multi_reduction <add>, %27, %cst_11 [1] : vector<3x4x1024xf32> to vector<3x1024xf32>
    %c0_12 = arith.constant 0 : index
    %c1 = arith.constant 1 : index
    %c0_13 = arith.constant 0 : index
    %c0_14 = arith.constant 0 : index
    %29 = vector.load %arg4[%c0_12, %c1, %c0_13, %c0_14] : memref<1x2x3x1024xf32, #tpu.memory_space<vmem>>, vector<1x1x3x1024xf32>
    %30 = vector.shape_cast %29 : vector<1x1x3x1024xf32> to vector<3x1024xf32>
    %31 = vector.shape_cast %28 : vector<3x1024xf32> to vector<1x1x3x1024xf32>
    tpu.vector_store %arg4[%c0_12, %c1, %c0_13, %c0_14], %31 {strides = array<i32>} : memref<1x2x3x1024xf32, #tpu.memory_space<vmem>>, vector<1x1x3x1024xf32>,
    return
  }
  func.func @transform_0(%arg0: i32, %arg1: i32) -> (i32, i32, i32, i32) {
    %c0_i32 = arith.constant 0 : i32
    %c0_i32_0 = arith.constant 0 : i32
    %c0_i32_1 = arith.constant 0 : i32
    return %arg1, %c0_i32, %c0_i32_0, %arg0 : i32, i32, i32, i32
  }
  func.func @transform_1(%arg0: i32, %arg1: i32) -> (i32, i32, i32, i32) {
    %c0_i32 = arith.constant 0 : i32
    %c0_i32_0 = arith.constant 0 : i32
    %c0_i32_1 = arith.constant 0 : i32
    %c0_i32_2 = arith.constant 0 : i32
    return %c0_i32, %c0_i32_0, %c0_i32_1, %arg0 : i32, i32, i32, i32
  }
  func.func @transform_2(%arg0: i32, %arg1: i32) -> (i32, i32, i32, i32) {
    %c0_i32 = arith.constant 0 : i32
    %c0_i32_0 = arith.constant 0 : i32
    %c0_i32_1 = arith.constant 0 : i32
    return %arg1, %c0_i32, %c0_i32_0, %arg0 : i32, i32, i32, i32
  }
}

module attributes {stable_mosaic.version = 11 : i64} {
  func.func @_bias_add_kernel(%arg0: i32, %arg1: memref<1x3x256xf32, #tpu.memory_space<vmem>>, %arg2: memref<1x3x1xf32, #tpu.memory_space<vmem>>, %arg3: memref<1x3x256xf32, #tpu.memory_space<vmem>>) attributes {dimension_semantics = [#tpu.dimension_semantics<parallel>], iteration_bounds = array<i64: 2>, scalar_prefetch = 0 : i64, scratch_operands = 0 : i64, tpu.core_type = #tpu.core_type<tc>, window_params = [{transform_indices = @transform_0, window_bounds = array<i64: 1, 3, 256>}, {pipeline_mode = #tpu.pipeline_mode<synchronous>, transform_indices = @transform_1, window_bounds = array<i64: 1, 3, 1>}, {transform_indices = @transform_2, window_bounds = array<i64: 1, 3, 256>}]} {
    %c0 = arith.constant 0 : index
    %c0_0 = arith.constant 0 : index
    %c0_1 = arith.constant 0 : index
    %0 = vector.load %arg1[%c0, %c0_0, %c0_1] : memref<1x3x256xf32, #tpu.memory_space<vmem>>, vector<1x3x256xf32>
    %c0_2 = arith.constant 0 : index
    %c0_3 = arith.constant 0 : index
    %c0_4 = arith.constant 0 : index
    %1 = vector.load %arg2[%c0_2, %c0_3, %c0_4] : memref<1x3x1xf32, #tpu.memory_space<vmem>>, vector<1x3x1xf32>
    %2 = vector.broadcast %1 : vector<1x3x1xf32> to vector<1x3x256xf32>
    %3 = arith.addf %0, %2 : vector<1x3x256xf32>
    %c0_5 = arith.constant 0 : index
    %c0_6 = arith.constant 0 : index
    %c0_7 = arith.constant 0 : index
    %4 = vector.load %arg3[%c0_5, %c0_6, %c0_7] : memref<1x3x256xf32, #tpu.memory_space<vmem>>, vector<1x3x256xf32>
    tpu.vector_store %arg3[%c0_5, %c0_6, %c0_7], %3 {strides = array<i32>} : memref<1x3x256xf32, #tpu.memory_space<vmem>>, vector<1x3x256xf32>,
    return
  }
  func.func @transform_0(%arg0: i32) -> (i32, i32, i32) {
    %c0_i32 = arith.constant 0 : i32
    %c0_i32_0 = arith.constant 0 : i32
    %c0_i32_1 = arith.constant 0 : i32
    return %arg0, %c0_i32, %c0_i32_0 : i32, i32, i32
  }
  func.func @transform_1(%arg0: i32) -> (i32, i32, i32) {
    %c0_i32 = arith.constant 0 : i32
    %c0_i32_0 = arith.constant 0 : i32
    %c0_i32_1 = arith.constant 0 : i32
    %c0_i32_2 = arith.constant 0 : i32
    return %c0_i32, %c0_i32_0, %c0_i32_1 : i32, i32, i32
  }
  func.func @transform_2(%arg0: i32) -> (i32, i32, i32) {
    %c0_i32 = arith.constant 0 : i32
    %c0_i32_0 = arith.constant 0 : i32
    %c0_i32_1 = arith.constant 0 : i32
    return %arg0, %c0_i32, %c0_i32_0 : i32, i32, i32
  }
}

</mosaic_0001>

<llo_original>
// kernel: fourier_conv2d_forward.2
$region0: #{fourier_conv2d_forward.2}
  #allocation0 [shape = 'u32[]', space=smem, size = 0x4, offset = 0x4, fixed_abs, tag = 'smem constant byte address 0x4 - core index']
  #allocation1 [shape = 'u32[144,128]{1,0:T(1,128)}', space=vmem, size = 0x12000, scoped, tag = 'internal scratch']
  %s0 = inlined_call_operand.vmem [shape: f32[2,2,4,1024], index: 0, kind: input, shape index: {}]
  %s1 = inlined_call_operand.vmem [shape: f32[3,2,4,1024], index: 1, kind: input, shape index: {}]
  %s2 = inlined_call_operand.vmem [shape: f32[2,2,3,1024], index: 2, kind: output, shape index: {}]
  %s3 = sld [smem:[#allocation0]]
  $region41: #{fourier_conv2d_forward.2} parent=0
    _
  %s5 = ssub.s32 1, %s3
  %s6 = scalar_select 0, %s5, %s3
  loop: start=0, step=1, limit=4
  $region2: #{fourier_conv2d_forward.2} parent=0 // loop_pre_header
    _
  $region3: #{fourier_conv2d_forward.2} parent=0 // loop_header
    %s8 = sphi 0, %s12
    %p9 = scmp.ge.s32.totalorder %s8, 4
    %s15 = sphi 0, %s27
    %s16 = sphi 0, %s23
    %s17 = sphi 0, %s15
    %s18 = sphi 0, %s16
    %s19 = sphi 0, %s17
    %s20 = sphi 0, %s18
    %s32 = sphi 0, %s34
    %s35 = sphi 0, %s32
    %s36 = sphi 0, %s35
    %s52 = sphi 0, %s36
    %s58 = sphi 0, %s60
    %s61 = sphi 0, %s58
    %s62 = sphi 0, %s61
    %s78 = sphi 0, %s62
    %s86 = sphi 0, %s88
    %s89 = sphi 0, %s86
    %s90 = sphi 0, %s89
    %s106 = sphi 0, %s90
  $region4: #{fourier_conv2d_forward.2} parent=0 // loop_header_branch
    %11 = sbr.rel (%p9) target = $region8
  $region5: #{fourier_conv2d_forward.2} parent=0 // loop_body
    %s13 = ssub.s32 %s8, 1
    %s14 = ssub.s32 %s8, 2
    %s21 = sadd.s32 1, %s16
    %p22 = scmp.ge.s32.totalorder %s21, 2
    %s23 = scalar_select %p22, 0, %s21
    %s24 = sadd.s32 1, %s15
    %s25 = scalar_select %p22, %s24, %s15
    %p26 = scmp.ge.s32.totalorder %s25, 1
    %s27 = scalar_select %p26, 0, %s25
    %s28 = ssub.s32 %s16, %s23
    %s29 = ssub.s32 %s15, %s27
    %s30 = sor.u32 %s28, %s29
    %p31 = scmp.eq.s32.totalorder %s30, 0
    %s33 = sadd.s32 %s32, 1
    %s34 = scalar_select %p31, %s32, %s33
    %p37 = pneg %p31
    %p38 = scmp.eq.s32.totalorder %s8, 1
    %p39 = por %p37, %p38
    %p40 = scmp.ne.s32.totalorder %s32, %s35
    %p41 = scmp.eq.s32.totalorder %s8, 0
    %p42 = por %p40, %p41
    %p43 = scmp.ne.s32.totalorder %s32, %s35
    %p44 = scmp.eq.s32.totalorder %s13, 1
    %p45 = por %p43, %p44
    %p46 = scmp.ne.s32.totalorder %s35, %s36
    %p47 = scmp.eq.s32.totalorder %s13, 0
    %p48 = por %p46, %p47
    %p49 = scmp.ne.s32.totalorder %s35, %s36
    %p50 = scmp.eq.s32.totalorder %s14, 1
    %p51 = por %p49, %p50
    %p53 = scmp.ne.s32.totalorder %s36, %s52
    %p54 = scmp.eq.s32.totalorder %s14, 0
    %p55 = por %p53, %p54
    %s56 = ssub.s32 %s15, %s27
    %p57 = scmp.eq.s32.totalorder %s56, 0
    %s59 = sadd.s32 %s58, 1
    %s60 = scalar_select %p57, %s58, %s59
    %p63 = pneg %p57
    %p64 = scmp.eq.s32.totalorder %s8, 1
    %p65 = por %p63, %p64
    %p66 = scmp.ne.s32.totalorder %s58, %s61
    %p67 = scmp.eq.s32.totalorder %s8, 0
    %p68 = por %p66, %p67
    %p69 = scmp.ne.s32.totalorder %s58, %s61
    %p70 = scmp.eq.s32.totalorder %s13, 1
    %p71 = por %p69, %p70
    %p72 = scmp.ne.s32.totalorder %s61, %s62
    %p73 = scmp.eq.s32.totalorder %s13, 0
    %p74 = por %p72, %p73
    %p75 = scmp.ne.s32.totalorder %s61, %s62
    %p76 = scmp.eq.s32.totalorder %s14, 1
    %p77 = por %p75, %p76
    %p79 = scmp.ne.s32.totalorder %s62, %s78
    %p80 = scmp.eq.s32.totalorder %s14, 0
    %p81 = por %p79, %p80
    %s82 = ssub.s32 %s16, %s23
    %s83 = ssub.s32 %s15, %s27
    %s84 = sor.u32 %s82, %s83
    %p85 = scmp.eq.s32.totalorder %s84, 0
    %s87 = sadd.s32 %s86, 1
    %s88 = scalar_select %p85, %s86, %s87
    %p91 = pneg %p85
    %p92 = scmp.eq.s32.totalorder %s8, 1
    %p93 = por %p91, %p92
    %p94 = scmp.ne.s32.totalorder %s86, %s89
    %p95 = scmp.eq.s32.totalorder %s8, 0
    %p96 = por %p94, %p95
    %p97 = scmp.ne.s32.totalorder %s86, %s89
    %p98 = scmp.eq.s32.totalorder %s13, 1
    %p99 = por %p97, %p98
    %p100 = scmp.ne.s32.totalorder %s89, %s90
    %p101 = scmp.eq.s32.totalorder %s13, 0
    %p102 = por %p100, %p101
    %p103 = scmp.ne.s32.totalorder %s89, %s90
    %p104 = scmp.eq.s32.totalorder %s14, 1
    %p105 = por %p103, %p104
    %p107 = scmp.ne.s32.totalorder %s90, %s106
    %p108 = scmp.eq.s32.totalorder %s14, 0
    %p109 = por %p107, %p108
    %p110 = scmp.le.s32.totalorder 1, %s8
    %p111 = scmp.lt.s32.totalorder %s8, 3
    %p112 = pnand %p110, %p111
    %p113 = pneg %p112
    // Predicated region
    $region9: #{fourier_conv2d_forward.2} parent=5 // pred_check
      _
    $region10: #{fourier_conv2d_forward.2} parent=5 // pred_check_branch
      %115 = sbr.rel (%p112) target = $region12
    $region11: #{fourier_conv2d_forward.2} parent=5 // pred_region
      %s116 = ssub.s32 %s8, 1
      // Predicated region
      $region13: #{fourier_conv2d_forward.2} parent=11 // pred_check
        %p117 = pneg %p74
      $region14: #{fourier_conv2d_forward.2} parent=11 // pred_check_branch
        %119 = sbr.rel (%p117) target = $region16
      $region15: #{fourier_conv2d_forward.2} parent=11 // pred_region
        %s120 = smul.u32 8, %s17
        %p121 = scmp.lt.s32.totalorder %s120, 7
        %s122 = scalar_select %p121, %s120, 7
        %s123 = smul.addr %s122, 4
        %s124 = scalar_lea.vmem %s1, %s123
        %s125 = smul.u32 8, %s17
      $region16: #{fourier_conv2d_forward.2} parent=11 // pred_fallthru
        _
    $region12: #{fourier_conv2d_forward.2} parent=5 // pred_fallthru
      _
    %p126 = scmp.lt.s32.totalorder %s8, 2
    // Predicated region
    $region17: #{fourier_conv2d_forward.2} parent=5 // pred_check
      %p127 = pneg %p126
    $region18: #{fourier_conv2d_forward.2} parent=5 // pred_check_branch
      %129 = sbr.rel (%p127) target = $region20
    $region19: #{fourier_conv2d_forward.2} parent=5 // pred_region
      // Predicated region
      $region21: #{fourier_conv2d_forward.2} parent=19 // pred_check
        %p130 = pneg %p42
      $region22: #{fourier_conv2d_forward.2} parent=19 // pred_check_branch
        %132 = sbr.rel (%p130) target = $region24
      $region23: #{fourier_conv2d_forward.2} parent=19 // pred_region
        %s133 = smul.u32 8, %s15
        %p134 = scmp.lt.s32.totalorder %s16, 1
        %s135 = scalar_select %p134, %s16, 1
        %p136 = scmp.lt.s32.totalorder %s133, 7
        %s137 = scalar_select %p136, %s133, 7
        %s138 = smul.addr %s135, 16
        %s139 = sadd.s32 %s137, %s138
        %s140 = smul.addr %s139, 4
        %s141 = scalar_lea.vmem %s0, %s140
        %s142 = smul.u32 8, %s15
      $region24: #{fourier_conv2d_forward.2} parent=19 // pred_fallthru
        _
    $region20: #{fourier_conv2d_forward.2} parent=5 // pred_fallthru
      _
    %p143 = scmp.le.s32.totalorder 1, %s8
    %p144 = scmp.lt.s32.totalorder %s8, 3
    %p145 = pnand %p143, %p144
    %p146 = pneg %p145
    // Predicated region
    $region25: #{fourier_conv2d_forward.2} parent=5 // pred_check
      _
    $region26: #{fourier_conv2d_forward.2} parent=5 // pred_check_branch
      %148 = sbr.rel (%p145) target = $region28
    $region27: #{fourier_conv2d_forward.2} parent=5 // pred_region
      %s149 = ssub.s32 %s8, 1
      %s150 = smul.u32 8, %s17
      %p151 = scmp.lt.s32.totalorder %s18, 1
      %s152 = scalar_select %p151, %s18, 1
      %p153 = scmp.lt.s32.totalorder %s150, 7
      %s154 = scalar_select %p153, %s150, 7
      %s155 = smul.addr %s152, 16
      %s156 = sadd.s32 %s154, %s155
      %s157 = smul.addr %s156, 4
      %s158 = scalar_lea.vmem %s0, %s157
      %p159 = pneg %p48
      %p160 = pneg %p45
      %s161 = smul.u32 8, %s17
      %p162 = scmp.lt.s32.totalorder %s161, 7
      %s163 = scalar_select %p162, %s161, 7
      %s164 = smul.addr %s163, 4
      %s165 = scalar_lea.vmem %s1, %s164
      %p166 = pneg %p74
      %p167 = pneg %p71
      %p168 = pneg %p102
      %p169 = pneg %p99
      %s170 = smul.u32 8, %s17
      %p171 = scmp.lt.s32.totalorder %s18, 1
      %s172 = scalar_select %p171, %s18, 1
      %p173 = scmp.lt.s32.totalorder %s170, 7
      %s174 = scalar_select %p173, %s170, 7
      %s175 = smul.addr %s172, 16
      %s176 = sadd.s32 %s174, %s175
      %s177 = smul.addr %s176, 4
      %s178 = scalar_lea.vmem %s2, %s177
      %s179 = smul.u32 8, %s17
      %p180 = scmp.lt.s32.totalorder %s18, 1
      %s181 = scalar_select %p180, %s18, 1
      %p182 = scmp.lt.s32.totalorder %s179, 7
      %s183 = scalar_select %p182, %s179, 7
      %s184 = smul.addr %s181, 16
      %s185 = sadd.s32 %s183, %s184
      %s186 = smul.addr %s185, 4
      %s187 = scalar_lea.vmem %s0, %s186
      %s188 = smul.u32 8, %s17
      %s189 = smul.u32 8, %s17
      %p190 = scmp.lt.s32.totalorder %s189, 7
      %s191 = scalar_select %p190, %s189, 7
      %s192 = smul.addr %s191, 4
      %s193 = scalar_lea.vmem %s1, %s192
      %s194 = smul.u32 8, %s17
      %s195 = smul.u32 8, %s17
      %p196 = scmp.lt.s32.totalorder %s18, 1
      %s197 = scalar_select %p196, %s18, 1
      %p198 = scmp.lt.s32.totalorder %s195, 7
      %s199 = scalar_select %p198, %s195, 7
      %s200 = smul.addr %s197, 16
      %s201 = sadd.s32 %s199, %s200
      %s202 = smul.addr %s201, 4
      %s203 = scalar_lea.vmem %s2, %s202
      %s204 = smul.u32 8, %s17
      %v205 = vld [vmem:[%s187] sm:$0xff]
      %v206 = vld [vmem:[%s187 + $0x8] sm:$0xff]
      %v207 = vld [vmem:[%s187 + $0x10] sm:$0xff]
      %v208 = vld [vmem:[%s187 + $0x18] sm:$0xff]
      %v209 = vld [vmem:[%s187 + $0x20] sm:$0xff]
      %v210 = vld [vmem:[%s187 + $0x28] sm:$0xff]
      %v211 = vld [vmem:[%s187 + $0x30] sm:$0xff]
      %v212 = vld [vmem:[%s187 + $0x38] sm:$0xff]
      %v213 = vld [vmem:[%s193] sm:$0xff]
      %v214 = vld [vmem:[%s193 + $0x8] sm:$0xff]
      %v215 = vld [vmem:[%s193 + $0x10] sm:$0xff]
      %v216 = vld [vmem:[%s193 + $0x18] sm:$0xff]
      %v217 = vld [vmem:[%s193 + $0x20] sm:$0xff]
      %v218 = vld [vmem:[%s193 + $0x28] sm:$0xff]
      %v219 = vld [vmem:[%s193 + $0x30] sm:$0xff]
      %v220 = vld [vmem:[%s193 + $0x38] sm:$0xff]
      %v221 = vld [vmem:[%s193 + $0x40] sm:$0xff]
      %v222 = vld [vmem:[%s193 + $0x48] sm:$0xff]
      %v223 = vld [vmem:[%s193 + $0x50] sm:$0xff]
      %v224 = vld [vmem:[%s193 + $0x58] sm:$0xff]
      %v225 = vld [vmem:[%s193 + $0x60] sm:$0xff]
      %v226 = vld [vmem:[%s193 + $0x68] sm:$0xff]
      %v227 = vld [vmem:[%s193 + $0x70] sm:$0xff]
      %v228 = vld [vmem:[%s193 + $0x78] sm:$0xff]
      %v229 = vld [vmem:[%s193 + $0x80] sm:$0xff]
      %v230 = vld [vmem:[%s193 + $0x88] sm:$0xff]
      %v231 = vld [vmem:[%s193 + $0x90] sm:$0xff]
      %v232 = vld [vmem:[%s193 + $0x98] sm:$0xff]
      %v233 = vld [vmem:[%s193 + $0xa0] sm:$0xff]
      %v234 = vld [vmem:[%s193 + $0xa8] sm:$0xff]
      %v235 = vld [vmem:[%s193 + $0xb0] sm:$0xff]
      %v236 = vld [vmem:[%s193 + $0xb8] sm:$0xff]
      %v237 = vmul.f32 %v205, %v213
      %v238 = vmul.f32 %v206, %v214
      %v239 = vmul.f32 %v207, %v215
      %v240 = vmul.f32 %v208, %v216
      %v241 = vmul.f32 %v205, %v221
      %v242 = vmul.f32 %v206, %v222
      %v243 = vmul.f32 %v207, %v223
      %v244 = vmul.f32 %v208, %v224
      %v245 = vmul.f32 %v205, %v229
      %v246 = vmul.f32 %v206, %v230
      %v247 = vmul.f32 %v207, %v231
      %v248 = vmul.f32 %v208, %v232
      %v249 = vmul.f32 %v209, %v217
      %v250 = vmul.f32 %v210, %v218
      %v251 = vmul.f32 %v211, %v219
      %v252 = vmul.f32 %v212, %v220
      %v253 = vmul.f32 %v209, %v225
      %v254 = vmul.f32 %v210, %v226
      %v255 = vmul.f32 %v211, %v227
      %v256 = vmul.f32 %v212, %v228
      %v257 = vmul.f32 %v209, %v233
      %v258 = vmul.f32 %v210, %v234
      %v259 = vmul.f32 %v211, %v235
      %v260 = vmul.f32 %v212, %v236
      %v261 = vsub.f32 %v237, %v249
      %v262 = vsub.f32 %v238, %v250
      %v263 = vsub.f32 %v239, %v251
      %v264 = vsub.f32 %v240, %v252
      %v265 = vsub.f32 %v241, %v253
      %v266 = vsub.f32 %v242, %v254
      %v267 = vsub.f32 %v243, %v255
      %v268 = vsub.f32 %v244, %v256
      %v269 = vsub.f32 %v245, %v257
      %v270 = vsub.f32 %v246, %v258
      %v271 = vsub.f32 %v247, %v259
      %v272 = vsub.f32 %v248, %v260
      %v285 = vcombine.high %v261, %v261
      %v286 = vcombine.high %v262, %v262
      %v287 = vcombine.high %v263, %v263
      %v288 = vcombine.high %v264, %v264
      %v289 = vcombine.high %v265, %v265
      %v290 = vcombine.high %v266, %v266
      %v291 = vcombine.high %v267, %v267
      %v292 = vcombine.high %v268, %v268
      %v293 = vcombine.high %v269, %v269
      %v294 = vcombine.high %v270, %v270
      %v295 = vcombine.high %v271, %v271
      %v296 = vcombine.high %v272, %v272
      %vm309 = vcmask 1043456
      %v310 = vsel %vm309, %v261, 0.0
      %v311 = vrot.slane %v310, 4
      %v312 = vadd.f32 %v310, %v311
      %v313 = vrot.slane %v312, 2
      %v314 = vadd.f32 %v312, %v313
      %v315 = vrot.slane %v314, 1
      %v316 = vadd.f32 %v314, %v315
      %v317 = vsel %vm309, %v285, 0.0
      %v318 = vrot.slane %v317, 4
      %v319 = vadd.f32 %v317, %v318
      %v320 = vrot.slane %v319, 2
      %v321 = vadd.f32 %v319, %v320
      %v322 = vrot.slane %v321, 1
      %v323 = vadd.f32 %v321, %v322
      %v324 = vsel %vm309, %v262, 0.0
      %v325 = vrot.slane %v324, 4
      %v326 = vadd.f32 %v324, %v325
      %v327 = vrot.slane %v326, 2
      %v328 = vadd.f32 %v326, %v327
      %v329 = vrot.slane %v328, 1
      %v330 = vadd.f32 %v328, %v329
      %v331 = vsel %vm309, %v286, 0.0
      %v332 = vrot.slane %v331, 4
      %v333 = vadd.f32 %v331, %v332
      %v334 = vrot.slane %v333, 2
      %v335 = vadd.f32 %v333, %v334
      %v336 = vrot.slane %v335, 1
      %v337 = vadd.f32 %v335, %v336
      %v338 = vsel %vm309, %v263, 0.0
      %v339 = vrot.slane %v338, 4
      %v340 = vadd.f32 %v338, %v339
      %v341 = vrot.slane %v340, 2
      %v342 = vadd.f32 %v340, %v341
      %v343 = vrot.slane %v342, 1
      %v344 = vadd.f32 %v342, %v343
      %v345 = vsel %vm309, %v287, 0.0
      %v346 = vrot.slane %v345, 4
      %v347 = vadd.f32 %v345, %v346
      %v348 = vrot.slane %v347, 2
      %v349 = vadd.f32 %v347, %v348
      %v350 = vrot.slane %v349, 1
      %v351 = vadd.f32 %v349, %v350
      %v352 = vsel %vm309, %v264, 0.0
      %v353 = vrot.slane %v352, 4
      %v354 = vadd.f32 %v352, %v353
      %v355 = vrot.slane %v354, 2
      %v356 = vadd.f32 %v354, %v355
      %v357 = vrot.slane %v356, 1
      %v358 = vadd.f32 %v356, %v357
      %v359 = vsel %vm309, %v288, 0.0
      %v360 = vrot.slane %v359, 4
      %v361 = vadd.f32 %v359, %v360
      %v362 = vrot.slane %v361, 2
      %v363 = vadd.f32 %v361, %v362
      %v364 = vrot.slane %v363, 1
      %v365 = vadd.f32 %v363, %v364
      %v366 = vsel %vm309, %v265, 0.0
      %v367 = vrot.slane %v366, 4
      %v368 = vadd.f32 %v366, %v367
      %v369 = vrot.slane %v368, 2
      %v370 = vadd.f32 %v368, %v369
      %v371 = vrot.slane %v370, 1
      %v372 = vadd.f32 %v370, %v371
      %v373 = vsel %vm309, %v289, 0.0
      %v374 = vrot.slane %v373, 4
      %v375 = vadd.f32 %v373, %v374
      %v376 = vrot.slane %v375, 2
      %v377 = vadd.f32 %v375, %v376
      %v378 = vrot.slane %v377, 1
      %v379 = vadd.f32 %v377, %v378
      %v380 = vsel %vm309, %v266, 0.0
      %v381 = vrot.slane %v380, 4
      %v382 = vadd.f32 %v380, %v381
      %v383 = vrot.slane %v382, 2
      %v384 = vadd.f32 %v382, %v383
      %v385 = vrot.slane %v384, 1
      %v386 = vadd.f32 %v384, %v385
      %v387 = vsel %vm309, %v290, 0.0
      %v388 = vrot.slane %v387, 4
      %v389 = vadd.f32 %v387, %v388
      %v390 = vrot.slane %v389, 2
      %v391 = vadd.f32 %v389, %v390
      %v392 = vrot.slane %v391, 1
      %v393 = vadd.f32 %v391, %v392
      %v394 = vsel %vm309, %v267, 0.0
      %v395 = vrot.slane %v394, 4
      %v396 = vadd.f32 %v394, %v395
      %v397 = vrot.slane %v396, 2
      %v398 = vadd.f32 %v396, %v397
      %v399 = vrot.slane %v398, 1
      %v400 = vadd.f32 %v398, %v399
      %v401 = vsel %vm309, %v291, 0.0
      %v402 = vrot.slane %v401, 4
      %v403 = vadd.f32 %v401, %v402
      %v404 = vrot.slane %v403, 2
      %v405 = vadd.f32 %v403, %v404
      %v406 = vrot.slane %v405, 1
      %v407 = vadd.f32 %v405, %v406
      %v408 = vsel %vm309, %v268, 0.0
      %v409 = vrot.slane %v408, 4
      %v410 = vadd.f32 %v408, %v409
      %v411 = vrot.slane %v410, 2
      %v412 = vadd.f32 %v410, %v411
      %v413 = vrot.slane %v412, 1
      %v414 = vadd.f32 %v412, %v413
      %v415 = vsel %vm309, %v292, 0.0
      %v416 = vrot.slane %v415, 4
      %v417 = vadd.f32 %v415, %v416
      %v418 = vrot.slane %v417, 2
      %v419 = vadd.f32 %v417, %v418
      %v420 = vrot.slane %v419, 1
      %v421 = vadd.f32 %v419, %v420
      %v422 = vsel %vm309, %v269, 0.0
      %v423 = vrot.slane %v422, 4
      %v424 = vadd.f32 %v422, %v423
      %v425 = vrot.slane %v424, 2
      %v426 = vadd.f32 %v424, %v425
      %v427 = vrot.slane %v426, 1
      %v428 = vadd.f32 %v426, %v427
      %v429 = vsel %vm309, %v293, 0.0
      %v430 = vrot.slane %v429, 4
      %v431 = vadd.f32 %v429, %v430
      %v432 = vrot.slane %v431, 2
      %v433 = vadd.f32 %v431, %v432
      %v434 = vrot.slane %v433, 1
      %v435 = vadd.f32 %v433, %v434
      %v436 = vsel %vm309, %v270, 0.0
      %v437 = vrot.slane %v436, 4
      %v438 = vadd.f32 %v436, %v437
      %v439 = vrot.slane %v438, 2
      %v440 = vadd.f32 %v438, %v439
      %v441 = vrot.slane %v440, 1
      %v442 = vadd.f32 %v440, %v441
      %v443 = vsel %vm309, %v294, 0.0
      %v444 = vrot.slane %v443, 4
      %v445 = vadd.f32 %v443, %v444
      %v446 = vrot.slane %v445, 2
      %v447 = vadd.f32 %v445, %v446
      %v448 = vrot.slane %v447, 1
      %v449 = vadd.f32 %v447, %v448
      %v450 = vsel %vm309, %v271, 0.0
      %v451 = vrot.slane %v450, 4
      %v452 = vadd.f32 %v450, %v451
      %v453 = vrot.slane %v452, 2
      %v454 = vadd.f32 %v452, %v453
      %v455 = vrot.slane %v454, 1
      %v456 = vadd.f32 %v454, %v455
      %v457 = vsel %vm309, %v295, 0.0
      %v458 = vrot.slane %v457, 4
      %v459 = vadd.f32 %v457, %v458
      %v460 = vrot.slane %v459, 2
      %v461 = vadd.f32 %v459, %v460
      %v462 = vrot.slane %v461, 1
      %v463 = vadd.f32 %v461, %v462
      %v464 = vsel %vm309, %v272, 0.0
      %v465 = vrot.slane %v464, 4
      %v466 = vadd.f32 %v464, %v465
      %v467 = vrot.slane %v466, 2
      %v468 = vadd.f32 %v466, %v467
      %v469 = vrot.slane %v468, 1
      %v470 = vadd.f32 %v468, %v469
      %v471 = vsel %vm309, %v296, 0.0
      %v472 = vrot.slane %v471, 4
      %v473 = vadd.f32 %v471, %v472
      %v474 = vrot.slane %v473, 2
      %v475 = vadd.f32 %v473, %v474
      %v476 = vrot.slane %v475, 1
      %v477 = vadd.f32 %v475, %v476
      %v502 = vcombine.low %v316, %v323
      %v503 = vcombine.low %v330, %v337
      %v504 = vcombine.low %v344, %v351
      %v505 = vcombine.low %v358, %v365
      %v506 = vcombine.low %v372, %v379
      %v507 = vcombine.low %v386, %v393
      %v508 = vcombine.low %v400, %v407
      %v509 = vcombine.low %v414, %v421
      %v510 = vcombine.low %v428, %v435
      %v511 = vcombine.low %v442, %v449
      %v512 = vcombine.low %v456, %v463
      %v513 = vcombine.low %v470, %v477
      %v514 = vrot.slane %v506, 7
      %vm515 = vcmask 1041409
      %v516 = vsel %vm515, %v514, %v502
      %vm517 = vcmask 1045509
      %v518 = vsel %vm517, %v514, %v516
      %v519 = vrot.slane %v510, 6
      %vm520 = vcmask 1042434
      %v521 = vsel %vm520, %v519, %v518
      %vm522 = vcmask 1046534
      %v523 = vsel %vm522, %v519, %v521
      %v524 = vrot.slane %v507, 7
      %v525 = vsel %vm515, %v524, %v503
      %v526 = vsel %vm517, %v524, %v525
      %v527 = vrot.slane %v511, 6
      %v528 = vsel %vm520, %v527, %v526
      %v529 = vsel %vm522, %v527, %v528
      %v530 = vrot.slane %v508, 7
      %v531 = vsel %vm515, %v530, %v504
      %v532 = vsel %vm517, %v530, %v531
      %v533 = vrot.slane %v512, 6
      %v534 = vsel %vm520, %v533, %v532
      %v535 = vsel %vm522, %v533, %v534
      %v536 = vrot.slane %v509, 7
      %v537 = vsel %vm515, %v536, %v505
      %v538 = vsel %vm517, %v536, %v537
      %v539 = vrot.slane %v513, 6
      %v540 = vsel %vm520, %v539, %v538
      %v541 = vsel %vm522, %v539, %v540
      %546 = vst [vmem:[%s203] sm:$0x77] %v523
      %547 = vst [vmem:[%s203 + $0x8] sm:$0x77] %v529
      %548 = vst [vmem:[%s203 + $0x10] sm:$0x77] %v535
      %549 = vst [vmem:[%s203 + $0x18] sm:$0x77] %v541
      %v550 = vmul.f32 %v205, %v217
      %v551 = vmul.f32 %v206, %v218
      %v552 = vmul.f32 %v207, %v219
      %v553 = vmul.f32 %v208, %v220
      %v554 = vmul.f32 %v205, %v225
      %v555 = vmul.f32 %v206, %v226
      %v556 = vmul.f32 %v207, %v227
      %v557 = vmul.f32 %v208, %v228
      %v558 = vmul.f32 %v205, %v233
      %v559 = vmul.f32 %v206, %v234
      %v560 = vmul.f32 %v207, %v235
      %v561 = vmul.f32 %v208, %v236
      %v562 = vmul.f32 %v209, %v213
      %v563 = vmul.f32 %v210, %v214
      %v564 = vmul.f32 %v211, %v215
      %v565 = vmul.f32 %v212, %v216
      %v566 = vmul.f32 %v209, %v221
      %v567 = vmul.f32 %v210, %v222
      %v568 = vmul.f32 %v211, %v223
      %v569 = vmul.f32 %v212, %v224
      %v570 = vmul.f32 %v209, %v229
      %v571 = vmul.f32 %v210, %v230
      %v572 = vmul.f32 %v211, %v231
      %v573 = vmul.f32 %v212, %v232
      %v574 = vadd.f32 %v550, %v562
      %v575 = vadd.f32 %v551, %v563
      %v576 = vadd.f32 %v552, %v564
      %v577 = vadd.f32 %v553, %v565
      %v578 = vadd.f32 %v554, %v566
      %v579 = vadd.f32 %v555, %v567
      %v580 = vadd.f32 %v556, %v568
      %v581 = vadd.f32 %v557, %v569
      %v582 = vadd.f32 %v558, %v570
      %v583 = vadd.f32 %v559, %v571
      %v584 = vadd.f32 %v560, %v572
      %v585 = vadd.f32 %v561, %v573
      %v598 = vcombine.high %v574, %v574
      %v599 = vcombine.high %v575, %v575
      %v600 = vcombine.high %v576, %v576
      %v601 = vcombine.high %v577, %v577
      %v602 = vcombine.high %v578, %v578
      %v603 = vcombine.high %v579, %v579
      %v604 = vcombine.high %v580, %v580
      %v605 = vcombine.high %v581, %v581
      %v606 = vcombine.high %v582, %v582
      %v607 = vcombine.high %v583, %v583
      %v608 = vcombine.high %v584, %v584
      %v609 = vcombine.high %v585, %v585
      %v622 = vsel %vm309, %v574, 0.0
      %v623 = vrot.slane %v622, 4
      %v624 = vadd.f32 %v622, %v623
      %v625 = vrot.slane %v624, 2
      %v626 = vadd.f32 %v624, %v625
      %v627 = vrot.slane %v626, 1
      %v628 = vadd.f32 %v626, %v627
      %v629 = vsel %vm309, %v598, 0.0
      %v630 = vrot.slane %v629, 4
      %v631 = vadd.f32 %v629, %v630
      %v632 = vrot.slane %v631, 2
      %v633 = vadd.f32 %v631, %v632
      %v634 = vrot.slane %v633, 1
      %v635 = vadd.f32 %v633, %v634
      %v636 = vsel %vm309, %v575, 0.0
      %v637 = vrot.slane %v636, 4
      %v638 = vadd.f32 %v636, %v637
      %v639 = vrot.slane %v638, 2
      %v640 = vadd.f32 %v638, %v639
      %v641 = vrot.slane %v640, 1
      %v642 = vadd.f32 %v640, %v641
      %v643 = vsel %vm309, %v599, 0.0
      %v644 = vrot.slane %v643, 4
      %v645 = vadd.f32 %v643, %v644
      %v646 = vrot.slane %v645, 2
      %v647 = vadd.f32 %v645, %v646
      %v648 = vrot.slane %v647, 1
      %v649 = vadd.f32 %v647, %v648
      %v650 = vsel %vm309, %v576, 0.0
      %v651 = vrot.slane %v650, 4
      %v652 = vadd.f32 %v650, %v651
      %v653 = vrot.slane %v652, 2
      %v654 = vadd.f32 %v652, %v653
      %v655 = vrot.slane %v654, 1
      %v656 = vadd.f32 %v654, %v655
      %v657 = vsel %vm309, %v600, 0.0
      %v658 = vrot.slane %v657, 4
      %v659 = vadd.f32 %v657, %v658
      %v660 = vrot.slane %v659, 2
      %v661 = vadd.f32 %v659, %v660
      %v662 = vrot.slane %v661, 1
      %v663 = vadd.f32 %v661, %v662
      %v664 = vsel %vm309, %v577, 0.0
      %v665 = vrot.slane %v664, 4
      %v666 = vadd.f32 %v664, %v665
      %v667 = vrot.slane %v666, 2
      %v668 = vadd.f32 %v666, %v667
      %v669 = vrot.slane %v668, 1
      %v670 = vadd.f32 %v668, %v669
      %v671 = vsel %vm309, %v601, 0.0
      %v672 = vrot.slane %v671, 4
      %v673 = vadd.f32 %v671, %v672
      %v674 = vrot.slane %v673, 2
      %v675 = vadd.f32 %v673, %v674
      %v676 = vrot.slane %v675, 1
      %v677 = vadd.f32 %v675, %v676
      %v678 = vsel %vm309, %v578, 0.0
      %v679 = vrot.slane %v678, 4
      %v680 = vadd.f32 %v678, %v679
      %v681 = vrot.slane %v680, 2
      %v682 = vadd.f32 %v680, %v681
      %v683 = vrot.slane %v682, 1
      %v684 = vadd.f32 %v682, %v683
      %v685 = vsel %vm309, %v602, 0.0
      %v686 = vrot.slane %v685, 4
      %v687 = vadd.f32 %v685, %v686
      %v688 = vrot.slane %v687, 2
      %v689 = vadd.f32 %v687, %v688
      %v690 = vrot.slane %v689, 1
      %v691 = vadd.f32 %v689, %v690
      %v692 = vsel %vm309, %v579, 0.0
      %v693 = vrot.slane %v692, 4
      %v694 = vadd.f32 %v692, %v693
      %v695 = vrot.slane %v694, 2
      %v696 = vadd.f32 %v694, %v695
      %v697 = vrot.slane %v696, 1
      %v698 = vadd.f32 %v696, %v697
      %v699 = vsel %vm309, %v603, 0.0
      %v700 = vrot.slane %v699, 4
      %v701 = vadd.f32 %v699, %v700
      %v702 = vrot.slane %v701, 2
      %v703 = vadd.f32 %v701, %v702
      %v704 = vrot.slane %v703, 1
      %v705 = vadd.f32 %v703, %v704
      %v706 = vsel %vm309, %v580, 0.0
      %v707 = vrot.slane %v706, 4
      %v708 = vadd.f32 %v706, %v707
      %v709 = vrot.slane %v708, 2
      %v710 = vadd.f32 %v708, %v709
      %v711 = vrot.slane %v710, 1
      %v712 = vadd.f32 %v710, %v711
      %v713 = vsel %vm309, %v604, 0.0
      %v714 = vrot.slane %v713, 4
      %v715 = vadd.f32 %v713, %v714
      %v716 = vrot.slane %v715, 2
      %v717 = vadd.f32 %v715, %v716
      %v718 = vrot.slane %v717, 1
      %v719 = vadd.f32 %v717, %v718
      %v720 = vsel %vm309, %v581, 0.0
      %v721 = vrot.slane %v720, 4
      %v722 = vadd.f32 %v720, %v721
      %v723 = vrot.slane %v722, 2
      %v724 = vadd.f32 %v722, %v723
      %v725 = vrot.slane %v724, 1
      %v726 = vadd.f32 %v724, %v725
      %v727 = vsel %vm309, %v605, 0.0
      %v728 = vrot.slane %v727, 4
      %v729 = vadd.f32 %v727, %v728
      %v730 = vrot.slane %v729, 2
      %v731 = vadd.f32 %v729, %v730
      %v732 = vrot.slane %v731, 1
      %v733 = vadd.f32 %v731, %v732
      %v734 = vsel %vm309, %v582, 0.0
      %v735 = vrot.slane %v734, 4
      %v736 = vadd.f32 %v734, %v735
      %v737 = vrot.slane %v736, 2
      %v738 = vadd.f32 %v736, %v737
      %v739 = vrot.slane %v738, 1
      %v740 = vadd.f32 %v738, %v739
      %v741 = vsel %vm309, %v606, 0.0
      %v742 = vrot.slane %v741, 4
      %v743 = vadd.f32 %v741, %v742
      %v744 = vrot.slane %v743, 2
      %v745 = vadd.f32 %v743, %v744
      %v746 = vrot.slane %v745, 1
      %v747 = vadd.f32 %v745, %v746
      %v748 = vsel %vm309, %v583, 0.0
      %v749 = vrot.slane %v748, 4
      %v750 = vadd.f32 %v748, %v749
      %v751 = vrot.slane %v750, 2
      %v752 = vadd.f32 %v750, %v751
      %v753 = vrot.slane %v752, 1
      %v754 = vadd.f32 %v752, %v753
      %v755 = vsel %vm309, %v607, 0.0
      %v756 = vrot.slane %v755, 4
      %v757 = vadd.f32 %v755, %v756
      %v758 = vrot.slane %v757, 2
      %v759 = vadd.f32 %v757, %v758
      %v760 = vrot.slane %v759, 1
      %v761 = vadd.f32 %v759, %v760
      %v762 = vsel %vm309, %v584, 0.0
      %v763 = vrot.slane %v762, 4
      %v764 = vadd.f32 %v762, %v763
      %v765 = vrot.slane %v764, 2
      %v766 = vadd.f32 %v764, %v765
      %v767 = vrot.slane %v766, 1
      %v768 = vadd.f32 %v766, %v767
      %v769 = vsel %vm309, %v608, 0.0
      %v770 = vrot.slane %v769, 4
      %v771 = vadd.f32 %v769, %v770
      %v772 = vrot.slane %v771, 2
      %v773 = vadd.f32 %v771, %v772
      %v774 = vrot.slane %v773, 1
      %v775 = vadd.f32 %v773, %v774
      %v776 = vsel %vm309, %v585, 0.0
      %v777 = vrot.slane %v776, 4
      %v778 = vadd.f32 %v776, %v777
      %v779 = vrot.slane %v778, 2
      %v780 = vadd.f32 %v778, %v779
      %v781 = vrot.slane %v780, 1
      %v782 = vadd.f32 %v780, %v781
      %v783 = vsel %vm309, %v609, 0.0
      %v784 = vrot.slane %v783, 4
      %v785 = vadd.f32 %v783, %v784
      %v786 = vrot.slane %v785, 2
      %v787 = vadd.f32 %v785, %v786
      %v788 = vrot.slane %v787, 1
      %v789 = vadd.f32 %v787, %v788
      %v814 = vcombine.low %v628, %v635
      %v815 = vcombine.low %v642, %v649
      %v816 = vcombine.low %v656, %v663
      %v817 = vcombine.low %v670, %v677
      %v818 = vcombine.low %v684, %v691
      %v819 = vcombine.low %v698, %v705
      %v820 = vcombine.low %v712, %v719
      %v821 = vcombine.low %v726, %v733
      %v822 = vcombine.low %v740, %v747
      %v823 = vcombine.low %v754, %v761
      %v824 = vcombine.low %v768, %v775
      %v825 = vcombine.low %v782, %v789
      %v826 = vrot.slane %v818, 7
      %v827 = vsel %vm515, %v826, %v814
      %v828 = vsel %vm517, %v826, %v827
      %v829 = vrot.slane %v822, 6
      %v830 = vsel %vm520, %v829, %v828
      %v831 = vsel %vm522, %v829, %v830
      %v832 = vrot.slane %v819, 7
      %v833 = vsel %vm515, %v832, %v815
      %v834 = vsel %vm517, %v832, %v833
      %v835 = vrot.slane %v823, 6
      %v836 = vsel %vm520, %v835, %v834
      %v837 = vsel %vm522, %v835, %v836
      %v838 = vrot.slane %v820, 7
      %v839 = vsel %vm515, %v838, %v816
      %v840 = vsel %vm517, %v838, %v839
      %v841 = vrot.slane %v824, 6
      %v842 = vsel %vm520, %v841, %v840
      %v843 = vsel %vm522, %v841, %v842
      %v844 = vrot.slane %v821, 7
      %v845 = vsel %vm515, %v844, %v817
      %v846 = vsel %vm517, %v844, %v845
      %v847 = vrot.slane %v825, 6
      %v848 = vsel %vm520, %v847, %v846
      %v849 = vsel %vm522, %v847, %v848
      %s854 = scalar_lea.vmem %s203, 32
      %855 = vst [vmem:[%s854] sm:$0x77] %v831
      %856 = vst [vmem:[%s854 + $0x8] sm:$0x77] %v837
      %857 = vst [vmem:[%s854 + $0x10] sm:$0x77] %v843
      %858 = vst [vmem:[%s854 + $0x18] sm:$0x77] %v849
      %s859 = smul.u32 8, %s17
      %p860 = scmp.lt.s32.totalorder %s18, 1
      %s861 = scalar_select %p860, %s18, 1
      %p862 = scmp.lt.s32.totalorder %s859, 7
      %s863 = scalar_select %p862, %s859, 7
      %s864 = smul.addr %s861, 16
      %s865 = sadd.s32 %s863, %s864
      %s866 = smul.addr %s865, 4
      %s867 = scalar_lea.vmem %s2, %s866
      // Predicated region
      $region29: #{fourier_conv2d_forward.2} parent=27 // pred_check
        %p868 = pneg %p99
      $region30: #{fourier_conv2d_forward.2} parent=27 // pred_check_branch
        %870 = sbr.rel (%p868) target = $region32
      $region31: #{fourier_conv2d_forward.2} parent=27 // pred_region
        %s871 = smul.u32 8, %s17
      $region32: #{fourier_conv2d_forward.2} parent=27 // pred_fallthru
        _
    $region28: #{fourier_conv2d_forward.2} parent=5 // pred_fallthru
      _
    %p872 = scmp.le.s32.totalorder 2, %s8
    // Predicated region
    $region33: #{fourier_conv2d_forward.2} parent=5 // pred_check
      %p873 = pneg %p872
    $region34: #{fourier_conv2d_forward.2} parent=5 // pred_check_branch
      %875 = sbr.rel (%p873) target = $region36
    $region35: #{fourier_conv2d_forward.2} parent=5 // pred_region
      %s876 = ssub.s32 %s8, 2
      // Predicated region
      $region37: #{fourier_conv2d_forward.2} parent=35 // pred_check
        %p877 = pneg %p105
      $region38: #{fourier_conv2d_forward.2} parent=35 // pred_check_branch
        %879 = sbr.rel (%p877) target = $region40
      $region39: #{fourier_conv2d_forward.2} parent=35 // pred_region
        %s880 = smul.u32 8, %s19
        %p881 = scmp.lt.s32.totalorder %s20, 1
        %s882 = scalar_select %p881, %s20, 1
        %p883 = scmp.lt.s32.totalorder %s880, 7
        %s884 = scalar_select %p883, %s880, 7
        %s885 = smul.addr %s882, 16
        %s886 = sadd.s32 %s884, %s885
        %s887 = smul.addr %s886, 4
        %s888 = scalar_lea.vmem %s2, %s887
      $region40: #{fourier_conv2d_forward.2} parent=35 // pred_fallthru
        _
    $region36: #{fourier_conv2d_forward.2} parent=5 // pred_fallthru
      _
  $region6: #{fourier_conv2d_forward.2} parent=0 // loop_footer
    %s12 = sadd.s32 1, %s8
  $region7: #{fourier_conv2d_forward.2} parent=0 // loop_footer_branch
    %7 = sbr.rel target = $region3
  $region8: #{fourier_conv2d_forward.2} parent=0 // loop_exit
    _

// kernel: fourier_conv2d_forward.3
$region0: #{fourier_conv2d_forward.3}
  #allocation0 [shape = 'u32[]', space=smem, size = 0x4, offset = 0x4, fixed_abs, tag = 'smem constant byte address 0x4 - core index']
  #allocation1 [shape = 'u32[144,128]{1,0:T(1,128)}', space=vmem, size = 0x12000, scoped, tag = 'internal scratch']
  %s0 = inlined_call_operand.vmem [shape: f32[2,3,256], index: 0, kind: input, shape index: {}]
  %s1 = inlined_call_operand.vmem [shape: f32[1,3,1], index: 1, kind: input, shape index: {}]
  %s2 = inlined_call_operand.vmem [shape: f32[2,3,256], index: 2, kind: output, shape index: {}]
  %s3 = sld [smem:[#allocation0]]
  $region41: #{fourier_conv2d_forward.3} parent=0
    _
  %s5 = ssub.s32 1, %s3
  %s6 = scalar_select 0, %s5, %s3
  loop: start=0, step=1, limit=4
  $region2: #{fourier_conv2d_forward.3} parent=0 // loop_pre_header
    _
  $region3: #{fourier_conv2d_forward.3} parent=0 // loop_header
    %s8 = sphi 0, %s12
    %p9 = scmp.ge.s32.totalorder %s8, 4
    %s18 = sphi 0, %s20
    %s21 = sphi 0, %s18
    %s22 = sphi 0, %s21
    %s38 = sphi 0, %s22
    %s42 = sphi 0, %s42
    %s44 = sphi 0, %s42
    %s45 = sphi 0, %s44
    %s59 = sphi 0, %s45
    %s65 = sphi 0, %s67
    %s68 = sphi 0, %s65
    %s69 = sphi 0, %s68
    %s85 = sphi 0, %s69
  $region4: #{fourier_conv2d_forward.3} parent=0 // loop_header_branch
    %11 = sbr.rel (%p9) target = $region8
  $region5: #{fourier_conv2d_forward.3} parent=0 // loop_body
    %s13 = ssub.s32 %s8, 1
    %s14 = ssub.s32 %s8, 2
    %s15 = sadd.s32 %s8, 1
    %s16 = ssub.s32 %s8, %s15
    %p17 = scmp.eq.s32.totalorder %s16, 0
    %s19 = sadd.s32 %s18, 1
    %s20 = scalar_select %p17, %s18, %s19
    %p23 = pneg %p17
    %p24 = scmp.eq.s32.totalorder %s8, 1
    %p25 = por %p23, %p24
    %p26 = scmp.ne.s32.totalorder %s18, %s21
    %p27 = scmp.eq.s32.totalorder %s8, 0
    %p28 = por %p26, %p27
    %p29 = scmp.ne.s32.totalorder %s18, %s21
    %p30 = scmp.eq.s32.totalorder %s13, 1
    %p31 = por %p29, %p30
    %p32 = scmp.ne.s32.totalorder %s21, %s22
    %p33 = scmp.eq.s32.totalorder %s13, 0
    %p34 = por %p32, %p33
    %p35 = scmp.ne.s32.totalorder %s21, %s22
    %p36 = scmp.eq.s32.totalorder %s14, 1
    %p37 = por %p35, %p36
    %p39 = scmp.ne.s32.totalorder %s22, %s38
    %p40 = scmp.eq.s32.totalorder %s14, 0
    %p41 = por %p39, %p40
    %s43 = sadd.s32 %s42, 1
    %p46 = scmp.eq.s32.totalorder %s8, 1
    %p47 = scmp.ne.s32.totalorder %s42, %s44
    %p48 = scmp.eq.s32.totalorder %s8, 0
    %p49 = por %p47, %p48
    %p50 = scmp.ne.s32.totalorder %s42, %s44
    %p51 = scmp.eq.s32.totalorder %s13, 1
    %p52 = por %p50, %p51
    %p53 = scmp.ne.s32.totalorder %s44, %s45
    %p54 = scmp.eq.s32.totalorder %s13, 0
    %p55 = por %p53, %p54
    %p56 = scmp.ne.s32.totalorder %s44, %s45
    %p57 = scmp.eq.s32.totalorder %s14, 1
    %p58 = por %p56, %p57
    %p60 = scmp.ne.s32.totalorder %s45, %s59
    %p61 = scmp.eq.s32.totalorder %s14, 0
    %p62 = por %p60, %p61
    %s63 = ssub.s32 %s8, %s15
    %p64 = scmp.eq.s32.totalorder %s63, 0
    %s66 = sadd.s32 %s65, 1
    %s67 = scalar_select %p64, %s65, %s66
    %p70 = pneg %p64
    %p71 = scmp.eq.s32.totalorder %s8, 1
    %p72 = por %p70, %p71
    %p73 = scmp.ne.s32.totalorder %s65, %s68
    %p74 = scmp.eq.s32.totalorder %s8, 0
    %p75 = por %p73, %p74
    %p76 = scmp.ne.s32.totalorder %s65, %s68
    %p77 = scmp.eq.s32.totalorder %s13, 1
    %p78 = por %p76, %p77
    %p79 = scmp.ne.s32.totalorder %s68, %s69
    %p80 = scmp.eq.s32.totalorder %s13, 0
    %p81 = por %p79, %p80
    %p82 = scmp.ne.s32.totalorder %s68, %s69
    %p83 = scmp.eq.s32.totalorder %s14, 1
    %p84 = por %p82, %p83
    %p86 = scmp.ne.s32.totalorder %s69, %s85
    %p87 = scmp.eq.s32.totalorder %s14, 0
    %p88 = por %p86, %p87
    %p89 = scmp.le.s32.totalorder 1, %s8
    %p90 = scmp.lt.s32.totalorder %s8, 3
    %p91 = pnand %p89, %p90
    %p92 = pneg %p91
    // Predicated region
    $region9: #{fourier_conv2d_forward.3} parent=5 // pred_check
      _
    $region10: #{fourier_conv2d_forward.3} parent=5 // pred_check_branch
      %94 = sbr.rel (%p91) target = $region12
    $region11: #{fourier_conv2d_forward.3} parent=5 // pred_region
      %s95 = ssub.s32 %s8, 1
      // Predicated region
      $region13: #{fourier_conv2d_forward.3} parent=11 // pred_check
        %p96 = pneg %p55
      $region14: #{fourier_conv2d_forward.3} parent=11 // pred_check_branch
        %98 = sbr.rel (%p96) target = $region16
      $region15: #{fourier_conv2d_forward.3} parent=11 // pred_region
        _
      $region16: #{fourier_conv2d_forward.3} parent=11 // pred_fallthru
        _
    $region12: #{fourier_conv2d_forward.3} parent=5 // pred_fallthru
      _
    %p99 = scmp.lt.s32.totalorder %s8, 2
    // Predicated region
    $region17: #{fourier_conv2d_forward.3} parent=5 // pred_check
      %p100 = pneg %p99
    $region18: #{fourier_conv2d_forward.3} parent=5 // pred_check_branch
      %102 = sbr.rel (%p100) target = $region20
    $region19: #{fourier_conv2d_forward.3} parent=5 // pred_region
      // Predicated region
      $region21: #{fourier_conv2d_forward.3} parent=19 // pred_check
        %p103 = pneg %p28
      $region22: #{fourier_conv2d_forward.3} parent=19 // pred_check_branch
        %105 = sbr.rel (%p103) target = $region24
      $region23: #{fourier_conv2d_forward.3} parent=19 // pred_region
        %p106 = scmp.lt.s32.totalorder %s8, 1
        %s107 = scalar_select %p106, %s8, 1
        %s108 = smul.addr %s107, 2
        %s109 = smul.addr %s108, 4
        %s110 = scalar_lea.vmem %s0, %s109
      $region24: #{fourier_conv2d_forward.3} parent=19 // pred_fallthru
        _
    $region20: #{fourier_conv2d_forward.3} parent=5 // pred_fallthru
      _
    %p111 = scmp.le.s32.totalorder 1, %s8
    %p112 = scmp.lt.s32.totalorder %s8, 3
    %p113 = pnand %p111, %p112
    %p114 = pneg %p113
    // Predicated region
    $region25: #{fourier_conv2d_forward.3} parent=5 // pred_check
      _
    $region26: #{fourier_conv2d_forward.3} parent=5 // pred_check_branch
      %116 = sbr.rel (%p113) target = $region28
    $region27: #{fourier_conv2d_forward.3} parent=5 // pred_region
      %s117 = ssub.s32 %s8, 1
      %p118 = scmp.lt.s32.totalorder %s13, 1
      %s119 = scalar_select %p118, %s13, 1
      %s120 = smul.addr %s119, 2
      %s121 = smul.addr %s120, 4
      %s122 = scalar_lea.vmem %s0, %s121
      %p123 = pneg %p34
      %p124 = pneg %p31
      %p125 = pneg %p55
      %p126 = pneg %p52
      %p127 = pneg %p81
      %p128 = pneg %p78
      %p129 = scmp.lt.s32.totalorder %s13, 1
      %s130 = scalar_select %p129, %s13, 1
      %s131 = smul.addr %s130, 2
      %s132 = smul.addr %s131, 4
      %s133 = scalar_lea.vmem %s2, %s132
      %p134 = scmp.lt.s32.totalorder %s13, 1
      %s135 = scalar_select %p134, %s13, 1
      %s136 = smul.addr %s135, 2
      %s137 = smul.addr %s136, 4
      %s138 = scalar_lea.vmem %s0, %s137
      %p139 = scmp.lt.s32.totalorder %s13, 1
      %s140 = scalar_select %p139, %s13, 1
      %s141 = smul.addr %s140, 2
      %s142 = smul.addr %s141, 4
      %s143 = scalar_lea.vmem %s2, %s142
      %v144 = vld [vmem:[%s138] sm:$0x77]
      %v145 = vld [vmem:[%s1] sm:$0x7]
      %147 = vset.pattern.permute.xlu0 0
      %148 = vperm.xlu0 %147, %v145
      %v149 = vpop.permute.xlu0 %148
      %v151 = vunpack.c.l.s4 839922192
      %v152 = vunpack.c.0.s8 %v151
      %v153 = vlaneseq
      %v154 = vshrl.u32 %v153, 7
      %v155 = vsub.s32 %v152, %v154
      %v156 = vrot.slane %v149, %v155
      %v158 = vadd.f32 %v144, %v156
      %159 = vst [vmem:[%s143] sm:$0x77] %v158
      %p160 = scmp.lt.s32.totalorder %s13, 1
      %s161 = scalar_select %p160, %s13, 1
      %s162 = smul.addr %s161, 2
      %s163 = smul.addr %s162, 4
      %s164 = scalar_lea.vmem %s2, %s163
      // Predicated region
      $region29: #{fourier_conv2d_forward.3} parent=27 // pred_check
        %p165 = pneg %p78
      $region30: #{fourier_conv2d_forward.3} parent=27 // pred_check_branch
        %167 = sbr.rel (%p165) target = $region32
      $region31: #{fourier_conv2d_forward.3} parent=27 // pred_region
        _
      $region32: #{fourier_conv2d_forward.3} parent=27 // pred_fallthru
        _
    $region28: #{fourier_conv2d_forward.3} parent=5 // pred_fallthru
      _
    %p168 = scmp.le.s32.totalorder 2, %s8
    // Predicated region
    $region33: #{fourier_conv2d_forward.3} parent=5 // pred_check
      %p169 = pneg %p168
    $region34: #{fourier_conv2d_forward.3} parent=5 // pred_check_branch
      %171 = sbr.rel (%p169) target = $region36
    $region35: #{fourier_conv2d_forward.3} parent=5 // pred_region
      %s172 = ssub.s32 %s8, 2
      // Predicated region
      $region37: #{fourier_conv2d_forward.3} parent=35 // pred_check
        %p173 = pneg %p84
      $region38: #{fourier_conv2d_forward.3} parent=35 // pred_check_branch
        %175 = sbr.rel (%p173) target = $region40
      $region39: #{fourier_conv2d_forward.3} parent=35 // pred_region
        %p176 = scmp.lt.s32.totalorder %s14, 1
        %s177 = scalar_select %p176, %s14, 1
        %s178 = smul.addr %s177, 2
        %s179 = smul.addr %s178, 4
        %s180 = scalar_lea.vmem %s2, %s179
      $region40: #{fourier_conv2d_forward.3} parent=35 // pred_fallthru
        _
    $region36: #{fourier_conv2d_forward.3} parent=5 // pred_fallthru
      _
  $region6: #{fourier_conv2d_forward.3} parent=0 // loop_footer
    %s12 = sadd.s32 1, %s8
  $region7: #{fourier_conv2d_forward.3} parent=0 // loop_footer_branch
    %7 = sbr.rel target = $region3
  $region8: #{fourier_conv2d_forward.3} parent=0 // loop_exit
    _

</llo_original>
